<compile_context>
chip_gen: v7x
topology: tpu7x:2x2x1
jax: 0.10.0
libtpu: 0.0.40
codegen_flags: <defaults>
</compile_context>

<pallas_src>
import functools

import jax
import jax.numpy as jnp
from jax.experimental import pallas as pl
from jax.experimental.pallas import tpu as pltpu

LANE = 128


def _round_up(v, m):
    return ((v + m - 1) // m) * m


def dqn_kernel(x_ref, w1_ref, b1_ref, w2_ref, b2_ref, w3_ref, b3_ref, o_ref):
    """Fused 3-layer MLP for one batch tile; all weights resident in VMEM."""
    # Cast f32 activations to bf16 on the VPU (hidden under the x DMA) so every
    # dot takes the bf16 MXU path; accumulation stays f32.
    x = x_ref[...].astype(w1_ref.dtype)
    h1 = jnp.dot(x, w1_ref[...], preferred_element_type=jnp.float32)
    h1 = jnp.maximum(h1 + b1_ref[...], 0.0)
    h2 = jnp.dot(h1.astype(w2_ref.dtype), w2_ref[...],
                 preferred_element_type=jnp.float32)
    h2 = jnp.maximum(h2 + b2_ref[...], 0.0)
    out = jnp.dot(h2.astype(w3_ref.dtype), w3_ref[...],
                  preferred_element_type=jnp.float32)
    o_ref[...] = (out + b3_ref[...]).astype(o_ref.dtype)


@functools.partial(jax.jit, static_argnames=("tb", "action_dim"))
def dqn_forward(x, w1, b1, w2, b2, w3, b3, *, tb=None, action_dim=None):
    B, D = x.shape
    H1 = w1.shape[1]
    H2 = w2.shape[1]
    A_pad = w3.shape[1]                      # lane-padded action dim (>= 128)
    if action_dim is None:
        action_dim = A_pad

    # Batch tile: multiple of 8 sublanes. Cap at 128 for the real 27648-wide
    # state (resident W1 + double-buffered f32 x tile must fit v7x's 64 MiB
    # per-TC VMEM), 256 otherwise. Weights stay resident either way, so W1 is
    # read from HBM exactly once regardless of the number of batch tiles.
    if tb is None:
        cap = 128 if D >= 8192 else 256
        tb = min(_round_up(B, 8), cap)
    Bp = _round_up(B, tb)
    num_tiles = Bp // tb

    # Only materialize a padded copy when B isn't a tile multiple (typical DQN
    # batch sizes — 8 / 32 / 64 / 128 / 256 — take the no-copy path).
    if Bp != B:
        x = jnp.pad(x, ((0, Bp - B), (0, 0)))

    nbytes = lambda a: a.size * a.dtype.itemsize
    resident_bytes = (nbytes(w1) + nbytes(w2) + nbytes(w3)
                      + nbytes(b1) + nbytes(b2) + nbytes(b3))     # Buffered(1)
    stream_bytes = 2 * tb * D * x.dtype.itemsize + 2 * tb * A_pad * 4  # x, out
    vmem_limit = int(min(max(resident_bytes + stream_bytes + (8 << 20), 32 << 20),
                         100 << 20))

    flops = 2 * B * (D * H1 + H1 * H2 + H2 * A_pad)
    bytes_accessed = resident_bytes + B * D * x.dtype.itemsize + B * A_pad * 4

    # Constant-index (resident) operands: single buffer — DMA'd once, reused.
    res = dict(pipeline_mode=pl.Buffered(1))

    out = pl.pallas_call(
        dqn_kernel,
        out_shape=jax.ShapeDtypeStruct((Bp, A_pad), jnp.float32),
        grid_spec=pltpu.PrefetchScalarGridSpec(
            num_scalar_prefetch=0,
            grid=(num_tiles,),
            in_specs=[
                pl.BlockSpec((tb, D), lambda i: (i, 0)),             # x batch tile
                pl.BlockSpec((D, H1), lambda i: (0, 0), **res),      # W1 (resident)
                pl.BlockSpec((1, H1), lambda i: (0, 0), **res),      # b1
                pl.BlockSpec((H1, H2), lambda i: (0, 0), **res),     # W2
                pl.BlockSpec((1, H2), lambda i: (0, 0), **res),      # b2
                pl.BlockSpec((H2, A_pad), lambda i: (0, 0), **res),  # W3 (lane-padded)
                pl.BlockSpec((1, A_pad), lambda i: (0, 0), **res),   # b3 (lane-padded)
            ],
            out_specs=pl.BlockSpec((tb, A_pad), lambda i: (i, 0)),
        ),
        compiler_params=pltpu.CompilerParams(
            # Splitting the batch across v7x's two TCs duplicates the resident
            # W1 HBM read; only worth it when each core gets plenty of tiles.
            dimension_semantics=(
                ("parallel",) if num_tiles >= 16 else ("arbitrary",)),
            vmem_limit_bytes=vmem_limit,
        ),
        cost_estimate=pl.CostEstimate(
            flops=flops, transcendentals=0, bytes_accessed=bytes_accessed),
    )(x, w1, b1, w2, b2, w3, b3)
    return out[:B, :action_dim]


def init_linear(key, fan_in, fan_out):
    """PyTorch-style uniform(-1/sqrt(fan_in), 1/sqrt(fan_in)); bf16 weights, f32 bias."""
    kw, kb = jax.random.split(key)
    bound = 1.0 / jnp.sqrt(jnp.float32(fan_in))
    w = jax.random.uniform(kw, (fan_in, fan_out), jnp.float32, -bound, bound)
    b = jax.random.uniform(kb, (1, fan_out), jnp.float32, -bound, bound)
    return w.astype(jnp.bfloat16), b


def reference_forward(x, w1, b1, w2, b2, w3, b3):
    """Pure-JAX reference with identical bf16-compute / f32-accumulate numerics."""
    xb = x.astype(jnp.bfloat16)
    h1 = jnp.maximum(
        jnp.dot(xb, w1, preferred_element_type=jnp.float32) + b1, 0.0)
    h2 = jnp.maximum(
        jnp.dot(h1.astype(jnp.bfloat16), w2,
                preferred_element_type=jnp.float32) + b2, 0.0)
    return jnp.dot(h2.astype(jnp.bfloat16), w3,
                   preferred_element_type=jnp.float32) + b3


if __name__ == "__main__":
    # Small stand-in shapes consistent with the module: batch=2,
    # state_dim=1024 (module default is 27648 — same kernel, just a bigger W1),
    # hidden dims 256/128, action_dim=3.
    BATCH = 2
    STATE_DIM = 1024
    H1, H2 = 256, 128
    ACTION_DIM = 3
    A_PAD = max(LANE, _round_up(ACTION_DIM, LANE))

    key = jax.random.PRNGKey(0)
    kx, k1, k2, k3 = jax.random.split(key, 4)

    x = jax.random.normal(kx, (BATCH, STATE_DIM), jnp.float32)
    w1, b1 = init_linear(k1, STATE_DIM, H1)
    w2, b2 = init_linear(k2, H1, H2)
    w3, b3 = init_linear(k3, H2, ACTION_DIM)

    # Pad the final layer to a lane-dense 128-wide slab once, at init time.
    w3p = jnp.pad(w3, ((0, 0), (0, A_PAD - ACTION_DIM)))
    b3p = jnp.pad(b3, ((0, 0), (0, A_PAD - ACTION_DIM)))

    out = dqn_forward(x, w1, b1, w2, b2, w3p, b3p, action_dim=ACTION_DIM)
    out = jax.block_until_ready(out)

    ref = reference_forward(x, w1, b1, w2, b2, w3, b3)
    assert out.shape == (BATCH, ACTION_DIM)
    assert jnp.allclose(out, ref, atol=2e-2, rtol=2e-2), "mismatch vs reference"

    print("KERNEL_OK")
</pallas_src>

<mosaic_0001>
module attributes {stable_mosaic.version = 11 : i64} {
  func.func @dqn_kernel(%arg0: i32, %arg1: memref<8x1024xf32, #tpu.memory_space<vmem>>, %arg2: memref<1024x256xbf16, #tpu.memory_space<vmem>>, %arg3: memref<1x256xf32, #tpu.memory_space<vmem>>, %arg4: memref<256x128xbf16, #tpu.memory_space<vmem>>, %arg5: memref<1x128xf32, #tpu.memory_space<vmem>>, %arg6: memref<128x128xbf16, #tpu.memory_space<vmem>>, %arg7: memref<1x128xf32, #tpu.memory_space<vmem>>, %arg8: memref<8x128xf32, #tpu.memory_space<vmem>>) attributes {dimension_semantics = [#tpu.dimension_semantics<arbitrary>], iteration_bounds = array<i64: 1>, scalar_prefetch = 0 : i64, scratch_operands = 0 : i64, tpu.core_type = #tpu.core_type<tc>, window_params = [{transform_indices = @transform_0, window_bounds = array<i64: 8, 1024>}, {pipeline_mode = #tpu.pipeline_mode<synchronous>, transform_indices = @transform_1, window_bounds = array<i64: 1024, 256>}, {pipeline_mode = #tpu.pipeline_mode<synchronous>, transform_indices = @transform_2, window_bounds = array<i64: 1, 256>}, {pipeline_mode = #tpu.pipeline_mode<synchronous>, transform_indices = @transform_3, window_bounds = array<i64: 256, 128>}, {pipeline_mode = #tpu.pipeline_mode<synchronous>, transform_indices = @transform_4, window_bounds = array<i64: 1, 128>}, {pipeline_mode = #tpu.pipeline_mode<synchronous>, transform_indices = @transform_5, window_bounds = array<i64: 128, 128>}, {pipeline_mode = #tpu.pipeline_mode<synchronous>, transform_indices = @transform_6, window_bounds = array<i64: 1, 128>}, {transform_indices = @transform_7, window_bounds = array<i64: 8, 128>}]} {
    %c0 = arith.constant 0 : index
    %c0_0 = arith.constant 0 : index
    %0 = vector.load %arg1[%c0, %c0_0] : memref<8x1024xf32, #tpu.memory_space<vmem>>, vector<8x1024xf32>
    %1 = arith.truncf %0 : vector<8x1024xf32> to vector<8x1024xbf16>
    %c0_1 = arith.constant 0 : index
    %c0_2 = arith.constant 0 : index
    %2 = vector.load %arg2[%c0_1, %c0_2] : memref<1024x256xbf16, #tpu.memory_space<vmem>>, vector<1024x256xbf16>
    %cst = arith.constant dense<0.000000e+00> : vector<8x256xf32>
    %3 = tpu.matmul %1, %2, %cst {dimension_numbers = #tpu.dot_dimension_numbers<[1], [0], [0], [1], [0, 0, 1, 1], [], []>} : vector<8x1024xbf16>, vector<1024x256xbf16>, vector<8x256xf32> -> vector<8x256xf32>
    %c0_3 = arith.constant 0 : index
    %c0_4 = arith.constant 0 : index
    %4 = vector.load %arg3[%c0_3, %c0_4] : memref<1x256xf32, #tpu.memory_space<vmem>>, vector<1x256xf32>
    %5 = vector.broadcast %4 : vector<1x256xf32> to vector<8x256xf32>
    %6 = arith.addf %3, %5 : vector<8x256xf32>
    %cst_5 = arith.constant 0.000000e+00 : f32
    %7 = vector.broadcast %cst_5 : f32 to vector<8x256xf32>
    %8 = arith.maximumf %6, %7 : vector<8x256xf32>
    %9 = arith.truncf %8 : vector<8x256xf32> to vector<8x256xbf16>
    %c0_6 = arith.constant 0 : index
    %c0_7 = arith.constant 0 : index
    %10 = vector.load %arg4[%c0_6, %c0_7] : memref<256x128xbf16, #tpu.memory_space<vmem>>, vector<256x128xbf16>
    %cst_8 = arith.constant dense<0.000000e+00> : vector<8x128xf32>
    %11 = tpu.matmul %9, %10, %cst_8 {dimension_numbers = #tpu.dot_dimension_numbers<[1], [0], [0], [1], [0, 0, 1, 1], [], []>} : vector<8x256xbf16>, vector<256x128xbf16>, vector<8x128xf32> -> vector<8x128xf32>
    %c0_9 = arith.constant 0 : index
    %c0_10 = arith.constant 0 : index
    %12 = vector.load %arg5[%c0_9, %c0_10] : memref<1x128xf32, #tpu.memory_space<vmem>>, vector<1x128xf32>
    %13 = vector.broadcast %12 : vector<1x128xf32> to vector<8x128xf32>
    %14 = arith.addf %11, %13 : vector<8x128xf32>
    %cst_11 = arith.constant 0.000000e+00 : f32
    %15 = vector.broadcast %cst_11 : f32 to vector<8x128xf32>
    %16 = arith.maximumf %14, %15 : vector<8x128xf32>
    %17 = arith.truncf %16 : vector<8x128xf32> to vector<8x128xbf16>
    %c0_12 = arith.constant 0 : index
    %c0_13 = arith.constant 0 : index
    %18 = vector.load %arg6[%c0_12, %c0_13] : memref<128x128xbf16, #tpu.memory_space<vmem>>, vector<128x128xbf16>
    %cst_14 = arith.constant dense<0.000000e+00> : vector<8x128xf32>
    %19 = tpu.matmul %17, %18, %cst_14 {dimension_numbers = #tpu.dot_dimension_numbers<[1], [0], [0], [1], [0, 0, 1, 1], [], []>} : vector<8x128xbf16>, vector<128x128xbf16>, vector<8x128xf32> -> vector<8x128xf32>
    %c0_15 = arith.constant 0 : index
    %c0_16 = arith.constant 0 : index
    %20 = vector.load %arg7[%c0_15, %c0_16] : memref<1x128xf32, #tpu.memory_space<vmem>>, vector<1x128xf32>
    %21 = vector.broadcast %20 : vector<1x128xf32> to vector<8x128xf32>
    %22 = arith.addf %19, %21 : vector<8x128xf32>
    %c0_17 = arith.constant 0 : index
    %c0_18 = arith.constant 0 : index
    %23 = vector.load %arg8[%c0_17, %c0_18] : memref<8x128xf32, #tpu.memory_space<vmem>>, vector<8x128xf32>
    tpu.vector_store %arg8[%c0_17, %c0_18], %22 {strides = array<i32>} : memref<8x128xf32, #tpu.memory_space<vmem>>, vector<8x128xf32>,
    return
  }
  func.func @transform_0(%arg0: i32) -> (i32, i32) {
    %c0_i32 = arith.constant 0 : i32
    %c0_i32_0 = arith.constant 0 : i32
    return %arg0, %c0_i32 : i32, i32
  }
  func.func @transform_1(%arg0: i32) -> (i32, i32) {
    %c0_i32 = arith.constant 0 : i32
    %c0_i32_0 = arith.constant 0 : i32
    %c0_i32_1 = arith.constant 0 : i32
    return %c0_i32, %c0_i32_0 : i32, i32
  }
  func.func @transform_2(%arg0: i32) -> (i32, i32) {
    %c0_i32 = arith.constant 0 : i32
    %c0_i32_0 = arith.constant 0 : i32
    %c0_i32_1 = arith.constant 0 : i32
    return %c0_i32, %c0_i32_0 : i32, i32
  }
  func.func @transform_3(%arg0: i32) -> (i32, i32) {
    %c0_i32 = arith.constant 0 : i32
    %c0_i32_0 = arith.constant 0 : i32
    %c0_i32_1 = arith.constant 0 : i32
    return %c0_i32, %c0_i32_0 : i32, i32
  }
  func.func @transform_4(%arg0: i32) -> (i32, i32) {
    %c0_i32 = arith.constant 0 : i32
    %c0_i32_0 = arith.constant 0 : i32
    %c0_i32_1 = arith.constant 0 : i32
    return %c0_i32, %c0_i32_0 : i32, i32
  }
  func.func @transform_5(%arg0: i32) -> (i32, i32) {
    %c0_i32 = arith.constant 0 : i32
    %c0_i32_0 = arith.constant 0 : i32
    %c0_i32_1 = arith.constant 0 : i32
    return %c0_i32, %c0_i32_0 : i32, i32
  }
  func.func @transform_6(%arg0: i32) -> (i32, i32) {
    %c0_i32 = arith.constant 0 : i32
    %c0_i32_0 = arith.constant 0 : i32
    %c0_i32_1 = arith.constant 0 : i32
    return %c0_i32, %c0_i32_0 : i32, i32
  }
  func.func @transform_7(%arg0: i32) -> (i32, i32) {
    %c0_i32 = arith.constant 0 : i32
    %c0_i32_0 = arith.constant 0 : i32
    return %arg0, %c0_i32 : i32, i32
  }
}

</mosaic_0001>

<llo_original>
// kernel: dqn_forward.1
$region0: #{dqn_forward.1}
  #allocation0 [shape = 'u32[]', space=smem, size = 0x4, offset = 0x4, fixed_abs, tag = 'smem constant byte address 0x4 - core index']
  #allocation1 [shape = 'u32[144,128]{1,0:T(1,128)}', space=vmem, size = 0x12000, scoped, tag = 'internal scratch']
  %s0 = inlined_call_operand.vmem [shape: f32[8,1024], index: 0, kind: input, shape index: {}]
  %s1 = inlined_call_operand.hbm [shape: bf16[1024,256], index: 1, kind: input, shape index: {}]
  %s2 = inlined_call_operand.vmem [shape: f32[1,256], index: 2, kind: input, shape index: {}]
  %s3 = inlined_call_operand.hbm [shape: bf16[256,128], index: 3, kind: input, shape index: {}]
  %s4 = inlined_call_operand.vmem [shape: f32[1,128], index: 4, kind: input, shape index: {}]
  %s5 = inlined_call_operand.vmem [shape: bf16[128,128], index: 5, kind: input, shape index: {}]
  %s6 = inlined_call_operand.vmem [shape: f32[1,128], index: 6, kind: input, shape index: {}]
  %s7 = inlined_call_operand.vmem [shape: f32[8,128], index: 7, kind: output, shape index: {}]
  %s8 = sld [smem:[#allocation0]]
  $region46: #{dqn_forward.1} parent=0
    _
  %s10 = ssub.s32 1, %s8
  %s11 = scalar_select 0, %s10, %s8
  $region1: #{dqn_forward.1} parent=0
    #allocation2 [shape = 'u8[524288]{0}', space=vmem, size = 0x80000, scoped, tag = 'input window, operand 1, single buffered']
    #allocation3 [shape = 's32[1]{0}', space=sflag, size = 0x4, scoped, tag = 'scoped memory for dqn_forward.1']
    #allocation4 [shape = 'u8[65536]{0}', space=vmem, size = 0x10000, scoped, tag = 'input window, operand 3, single buffered']
    #allocation5 [shape = 's32[1]{0}', space=sflag, size = 0x4, scoped, tag = 'scoped memory for dqn_forward.1']
    %12 = vsyncpa [#allocation3], 0
    %13 = vsyncpa [#allocation5], 0
    // Predicated region
    $region2: #{dqn_forward.1} parent=1 // pred_check
      _
    $region3: #{dqn_forward.1} parent=1 // pred_check_branch
      %15 = sbr.rel (0) target = $region5
    $region4: #{dqn_forward.1} parent=1 // pred_region
      _
    $region5: #{dqn_forward.1} parent=1 // pred_fallthru
      _
    // Predicated region
    $region6: #{dqn_forward.1} parent=1 // pred_check
      _
    $region7: #{dqn_forward.1} parent=1 // pred_check_branch
      %17 = sbr.rel (0) target = $region9
    $region8: #{dqn_forward.1} parent=1 // pred_region
      %s19 = ssub.s32 16384, 16384
      %20 = vsyncadd [#allocation3], %s19
      %s21 = sshll.u32 [#allocation2], 4
      %s22 = int_to_ptr.vmem [resolvable:$true] %s21
      %27 = dma.hbm_to_vmem [thread:$0]  %s1, 16384, %s22, [#allocation3], 128, 128, 8
    $region9: #{dqn_forward.1} parent=1 // pred_fallthru
      _
    // Predicated region
    $region10: #{dqn_forward.1} parent=1 // pred_check
      _
    $region11: #{dqn_forward.1} parent=1 // pred_check_branch
      %29 = sbr.rel (0) target = $region13
    $region12: #{dqn_forward.1} parent=1 // pred_region
      _
    $region13: #{dqn_forward.1} parent=1 // pred_fallthru
      _
    // Predicated region
    $region14: #{dqn_forward.1} parent=1 // pred_check
      _
    $region15: #{dqn_forward.1} parent=1 // pred_check_branch
      %31 = sbr.rel (0) target = $region17
    $region16: #{dqn_forward.1} parent=1 // pred_region
      %s33 = ssub.s32 2048, 2048
      %34 = vsyncadd [#allocation5], %s33
      %s35 = sshll.u32 [#allocation4], 4
      %s36 = int_to_ptr.vmem [resolvable:$true] %s35
      %41 = dma.hbm_to_vmem [thread:$0]  %s3, 2048, %s36, [#allocation5], 64, 64, 4
    $region17: #{dqn_forward.1} parent=1 // pred_fallthru
      _
    // Predicated region
    $region18: #{dqn_forward.1} parent=1 // pred_check
      _
    $region19: #{dqn_forward.1} parent=1 // pred_check_branch
      %43 = sbr.rel (0) target = $region21
    $region20: #{dqn_forward.1} parent=1 // pred_region
      _
    $region21: #{dqn_forward.1} parent=1 // pred_fallthru
      _
    // Predicated region
    $region22: #{dqn_forward.1} parent=1 // pred_check
      _
    $region23: #{dqn_forward.1} parent=1 // pred_check_branch
      %45 = sbr.rel (0) target = $region25
    $region24: #{dqn_forward.1} parent=1 // pred_region
      _
    $region25: #{dqn_forward.1} parent=1 // pred_fallthru
      _
    // Predicated region
    $region26: #{dqn_forward.1} parent=1 // pred_check
      _
    $region27: #{dqn_forward.1} parent=1 // pred_check_branch
      %47 = sbr.rel (0) target = $region29
    $region28: #{dqn_forward.1} parent=1 // pred_region
      _
    $region29: #{dqn_forward.1} parent=1 // pred_fallthru
      _
    // Predicated region
    $region30: #{dqn_forward.1} parent=1 // pred_check
      _
    $region31: #{dqn_forward.1} parent=1 // pred_check_branch
      %49 = sbr.rel (0) target = $region33
    $region32: #{dqn_forward.1} parent=1 // pred_region
      %50 = dma.done [#allocation3], 16384
    $region33: #{dqn_forward.1} parent=1 // pred_fallthru
      _
    // Predicated region
    $region34: #{dqn_forward.1} parent=1 // pred_check
      _
    $region35: #{dqn_forward.1} parent=1 // pred_check_branch
      %52 = sbr.rel (0) target = $region37
    $region36: #{dqn_forward.1} parent=1 // pred_region
      %53 = dma.done [#allocation5], 2048
    $region37: #{dqn_forward.1} parent=1 // pred_fallthru
      _
    %v55 = vld [vmem:[%s0] sm:$0xff]
    %v56 = vld [vmem:[%s0 + $0x8] sm:$0xff]
    %v57 = vld [vmem:[%s0 + $0x10] sm:$0xff]
    %v58 = vld [vmem:[%s0 + $0x18] sm:$0xff]
    %v59 = vld [vmem:[%s0 + $0x20] sm:$0xff]
    %v60 = vld [vmem:[%s0 + $0x28] sm:$0xff]
    %v61 = vld [vmem:[%s0 + $0x30] sm:$0xff]
    %v62 = vld [vmem:[%s0 + $0x38] sm:$0xff]
    %v63 = vpack.c.bf16 %v55, %v55
    %v64 = vpack.c.bf16 %v56, %v56
    %v65 = vpack.c.bf16 %v57, %v57
    %v66 = vpack.c.bf16 %v58, %v58
    %v67 = vpack.c.bf16 %v59, %v59
    %v68 = vpack.c.bf16 %v60, %v60
    %v69 = vpack.c.bf16 %v61, %v61
    %v70 = vpack.c.bf16 %v62, %v62
    %v71 = vld [vmem:[#allocation2] sm:$0xff]
    %v72 = vld [vmem:[#allocation2 + $0x8] sm:$0xff]
    %v73 = vld [vmem:[#allocation2 + $0x10] sm:$0xff]
    %v74 = vld [vmem:[#allocation2 + $0x18] sm:$0xff]
    %v75 = vld [vmem:[#allocation2 + $0x20] sm:$0xff]
    %v76 = vld [vmem:[#allocation2 + $0x28] sm:$0xff]
    %v77 = vld [vmem:[#allocation2 + $0x30] sm:$0xff]
    %v78 = vld [vmem:[#allocation2 + $0x38] sm:$0xff]
    %v79 = vld [vmem:[#allocation2 + $0x40] sm:$0xff]
    %v80 = vld [vmem:[#allocation2 + $0x48] sm:$0xff]
    %v81 = vld [vmem:[#allocation2 + $0x50] sm:$0xff]
    %v82 = vld [vmem:[#allocation2 + $0x58] sm:$0xff]
    %v83 = vld [vmem:[#allocation2 + $0x60] sm:$0xff]
    %v84 = vld [vmem:[#allocation2 + $0x68] sm:$0xff]
    %v85 = vld [vmem:[#allocation2 + $0x70] sm:$0xff]
    %v86 = vld [vmem:[#allocation2 + $0x78] sm:$0xff]
    %v87 = vld [vmem:[#allocation2 + $0x80] sm:$0xff]
    %v88 = vld [vmem:[#allocation2 + $0x88] sm:$0xff]
    %v89 = vld [vmem:[#allocation2 + $0x90] sm:$0xff]
    %v90 = vld [vmem:[#allocation2 + $0x98] sm:$0xff]
    %v91 = vld [vmem:[#allocation2 + $0xa0] sm:$0xff]
    %v92 = vld [vmem:[#allocation2 + $0xa8] sm:$0xff]
    %v93 = vld [vmem:[#allocation2 + $0xb0] sm:$0xff]
    %v94 = vld [vmem:[#allocation2 + $0xb8] sm:$0xff]
    %v95 = vld [vmem:[#allocation2 + $0xc0] sm:$0xff]
    %v96 = vld [vmem:[#allocation2 + $0xc8] sm:$0xff]
    %v97 = vld [vmem:[#allocation2 + $0xd0] sm:$0xff]
    %v98 = vld [vmem:[#allocation2 + $0xd8] sm:$0xff]
    %v99 = vld [vmem:[#allocation2 + $0xe0] sm:$0xff]
    %v100 = vld [vmem:[#allocation2 + $0xe8] sm:$0xff]
    %v101 = vld [vmem:[#allocation2 + $0xf0] sm:$0xff]
    %v102 = vld [vmem:[#allocation2 + $0xf8] sm:$0xff]
    %v103 = vld [vmem:[#allocation2 + $0x100] sm:$0xff]
    %v104 = vld [vmem:[#allocation2 + $0x108] sm:$0xff]
    %v105 = vld [vmem:[#allocation2 + $0x110] sm:$0xff]
    %v106 = vld [vmem:[#allocation2 + $0x118] sm:$0xff]
    %v107 = vld [vmem:[#allocation2 + $0x120] sm:$0xff]
    %v108 = vld [vmem:[#allocation2 + $0x128] sm:$0xff]
    %v109 = vld [vmem:[#allocation2 + $0x130] sm:$0xff]
    %v110 = vld [vmem:[#allocation2 + $0x138] sm:$0xff]
    %v111 = vld [vmem:[#allocation2 + $0x140] sm:$0xff]
    %v112 = vld [vmem:[#allocation2 + $0x148] sm:$0xff]
    %v113 = vld [vmem:[#allocation2 + $0x150] sm:$0xff]
    %v114 = vld [vmem:[#allocation2 + $0x158] sm:$0xff]
    %v115 = vld [vmem:[#allocation2 + $0x160] sm:$0xff]
    %v116 = vld [vmem:[#allocation2 + $0x168] sm:$0xff]
    %v117 = vld [vmem:[#allocation2 + $0x170] sm:$0xff]
    %v118 = vld [vmem:[#allocation2 + $0x178] sm:$0xff]
    %v119 = vld [vmem:[#allocation2 + $0x180] sm:$0xff]
    %v120 = vld [vmem:[#allocation2 + $0x188] sm:$0xff]
    %v121 = vld [vmem:[#allocation2 + $0x190] sm:$0xff]
    %v122 = vld [vmem:[#allocation2 + $0x198] sm:$0xff]
    %v123 = vld [vmem:[#allocation2 + $0x1a0] sm:$0xff]
    %v124 = vld [vmem:[#allocation2 + $0x1a8] sm:$0xff]
    %v125 = vld [vmem:[#allocation2 + $0x1b0] sm:$0xff]
    %v126 = vld [vmem:[#allocation2 + $0x1b8] sm:$0xff]
    %v127 = vld [vmem:[#allocation2 + $0x1c0] sm:$0xff]
    %v128 = vld [vmem:[#allocation2 + $0x1c8] sm:$0xff]
    %v129 = vld [vmem:[#allocation2 + $0x1d0] sm:$0xff]
    %v130 = vld [vmem:[#allocation2 + $0x1d8] sm:$0xff]
    %v131 = vld [vmem:[#allocation2 + $0x1e0] sm:$0xff]
    %v132 = vld [vmem:[#allocation2 + $0x1e8] sm:$0xff]
    %v133 = vld [vmem:[#allocation2 + $0x1f0] sm:$0xff]
    %v134 = vld [vmem:[#allocation2 + $0x1f8] sm:$0xff]
    %v135 = vld [vmem:[#allocation2 + $0x200] sm:$0xff]
    %v136 = vld [vmem:[#allocation2 + $0x208] sm:$0xff]
    %v137 = vld [vmem:[#allocation2 + $0x210] sm:$0xff]
    %v138 = vld [vmem:[#allocation2 + $0x218] sm:$0xff]
    %v139 = vld [vmem:[#allocation2 + $0x220] sm:$0xff]
    %v140 = vld [vmem:[#allocation2 + $0x228] sm:$0xff]
    %v141 = vld [vmem:[#allocation2 + $0x230] sm:$0xff]
    %v142 = vld [vmem:[#allocation2 + $0x238] sm:$0xff]
    %v143 = vld [vmem:[#allocation2 + $0x240] sm:$0xff]
    %v144 = vld [vmem:[#allocation2 + $0x248] sm:$0xff]
    %v145 = vld [vmem:[#allocation2 + $0x250] sm:$0xff]
    %v146 = vld [vmem:[#allocation2 + $0x258] sm:$0xff]
    %v147 = vld [vmem:[#allocation2 + $0x260] sm:$0xff]
    %v148 = vld [vmem:[#allocation2 + $0x268] sm:$0xff]
    %v149 = vld [vmem:[#allocation2 + $0x270] sm:$0xff]
    %v150 = vld [vmem:[#allocation2 + $0x278] sm:$0xff]
    %v151 = vld [vmem:[#allocation2 + $0x280] sm:$0xff]
    %v152 = vld [vmem:[#allocation2 + $0x288] sm:$0xff]
    %v153 = vld [vmem:[#allocation2 + $0x290] sm:$0xff]
    %v154 = vld [vmem:[#allocation2 + $0x298] sm:$0xff]
    %v155 = vld [vmem:[#allocation2 + $0x2a0] sm:$0xff]
    %v156 = vld [vmem:[#allocation2 + $0x2a8] sm:$0xff]
    %v157 = vld [vmem:[#allocation2 + $0x2b0] sm:$0xff]
    %v158 = vld [vmem:[#allocation2 + $0x2b8] sm:$0xff]
    %v159 = vld [vmem:[#allocation2 + $0x2c0] sm:$0xff]
    %v160 = vld [vmem:[#allocation2 + $0x2c8] sm:$0xff]
    %v161 = vld [vmem:[#allocation2 + $0x2d0] sm:$0xff]
    %v162 = vld [vmem:[#allocation2 + $0x2d8] sm:$0xff]
    %v163 = vld [vmem:[#allocation2 + $0x2e0] sm:$0xff]
    %v164 = vld [vmem:[#allocation2 + $0x2e8] sm:$0xff]
    %v165 = vld [vmem:[#allocation2 + $0x2f0] sm:$0xff]
    %v166 = vld [vmem:[#allocation2 + $0x2f8] sm:$0xff]
    %v167 = vld [vmem:[#allocation2 + $0x300] sm:$0xff]
    %v168 = vld [vmem:[#allocation2 + $0x308] sm:$0xff]
    %v169 = vld [vmem:[#allocation2 + $0x310] sm:$0xff]
    %v170 = vld [vmem:[#allocation2 + $0x318] sm:$0xff]
    %v171 = vld [vmem:[#allocation2 + $0x320] sm:$0xff]
    %v172 = vld [vmem:[#allocation2 + $0x328] sm:$0xff]
    %v173 = vld [vmem:[#allocation2 + $0x330] sm:$0xff]
    %v174 = vld [vmem:[#allocation2 + $0x338] sm:$0xff]
    %v175 = vld [vmem:[#allocation2 + $0x340] sm:$0xff]
    %v176 = vld [vmem:[#allocation2 + $0x348] sm:$0xff]
    %v177 = vld [vmem:[#allocation2 + $0x350] sm:$0xff]
    %v178 = vld [vmem:[#allocation2 + $0x358] sm:$0xff]
    %v179 = vld [vmem:[#allocation2 + $0x360] sm:$0xff]
    %v180 = vld [vmem:[#allocation2 + $0x368] sm:$0xff]
    %v181 = vld [vmem:[#allocation2 + $0x370] sm:$0xff]
    %v182 = vld [vmem:[#allocation2 + $0x378] sm:$0xff]
    %v183 = vld [vmem:[#allocation2 + $0x380] sm:$0xff]
    %v184 = vld [vmem:[#allocation2 + $0x388] sm:$0xff]
    %v185 = vld [vmem:[#allocation2 + $0x390] sm:$0xff]
    %v186 = vld [vmem:[#allocation2 + $0x398] sm:$0xff]
    %v187 = vld [vmem:[#allocation2 + $0x3a0] sm:$0xff]
    %v188 = vld [vmem:[#allocation2 + $0x3a8] sm:$0xff]
    %v189 = vld [vmem:[#allocation2 + $0x3b0] sm:$0xff]
    %v190 = vld [vmem:[#allocation2 + $0x3b8] sm:$0xff]
    %v191 = vld [vmem:[#allocation2 + $0x3c0] sm:$0xff]
    %v192 = vld [vmem:[#allocation2 + $0x3c8] sm:$0xff]
    %v193 = vld [vmem:[#allocation2 + $0x3d0] sm:$0xff]
    %v194 = vld [vmem:[#allocation2 + $0x3d8] sm:$0xff]
    %v195 = vld [vmem:[#allocation2 + $0x3e0] sm:$0xff]
    %v196 = vld [vmem:[#allocation2 + $0x3e8] sm:$0xff]
    %v197 = vld [vmem:[#allocation2 + $0x3f0] sm:$0xff]
    %v198 = vld [vmem:[#allocation2 + $0x3f8] sm:$0xff]
    %v199 = vld [vmem:[%s2] sm:$0x3]
    %v201 = vlaneseq
    %v202 = vshrl.u32 %v201, 7
    %v203 = vsub.s32 0, %v202
    %v204 = vrot.slane %v199, %v203
    %v205 = vlaneseq
    %v206 = vshrl.u32 %v205, 7
    %v207 = vsub.s32 1, %v206
    %v208 = vrot.slane %v199, %v207
    %v339 = vunpack.c.l.b16 %v71
    %v340 = vunpack.c.h.b16 %v71
    %v341 = vunpack.c.l.b16 %v72
    %v342 = vunpack.c.h.b16 %v72
    %v343 = vunpack.c.l.b16 %v73
    %v344 = vunpack.c.h.b16 %v73
    %v345 = vunpack.c.l.b16 %v74
    %v346 = vunpack.c.h.b16 %v74
    %v347 = vunpack.c.l.b16 %v75
    %v348 = vunpack.c.h.b16 %v75
    %v349 = vunpack.c.l.b16 %v76
    %v350 = vunpack.c.h.b16 %v76
    %v351 = vunpack.c.l.b16 %v77
    %v352 = vunpack.c.h.b16 %v77
    %v353 = vunpack.c.l.b16 %v78
    %v354 = vunpack.c.h.b16 %v78
    %v355 = vunpack.c.l.b16 %v79
    %v356 = vunpack.c.h.b16 %v79
    %v357 = vunpack.c.l.b16 %v80
    %v358 = vunpack.c.h.b16 %v80
    %v359 = vunpack.c.l.b16 %v81
    %v360 = vunpack.c.h.b16 %v81
    %v361 = vunpack.c.l.b16 %v82
    %v362 = vunpack.c.h.b16 %v82
    %v363 = vunpack.c.l.b16 %v83
    %v364 = vunpack.c.h.b16 %v83
    %v365 = vunpack.c.l.b16 %v84
    %v366 = vunpack.c.h.b16 %v84
    %v367 = vunpack.c.l.b16 %v85
    %v368 = vunpack.c.h.b16 %v85
    %v369 = vunpack.c.l.b16 %v86
    %v370 = vunpack.c.h.b16 %v86
    %v371 = vunpack.c.l.b16 %v87
    %v372 = vunpack.c.h.b16 %v87
    %v373 = vunpack.c.l.b16 %v88
    %v374 = vunpack.c.h.b16 %v88
    %v375 = vunpack.c.l.b16 %v89
    %v376 = vunpack.c.h.b16 %v89
    %v377 = vunpack.c.l.b16 %v90
    %v378 = vunpack.c.h.b16 %v90
    %v379 = vunpack.c.l.b16 %v91
    %v380 = vunpack.c.h.b16 %v91
    %v381 = vunpack.c.l.b16 %v92
    %v382 = vunpack.c.h.b16 %v92
    %v383 = vunpack.c.l.b16 %v93
    %v384 = vunpack.c.h.b16 %v93
    %v385 = vunpack.c.l.b16 %v94
    %v386 = vunpack.c.h.b16 %v94
    %v387 = vunpack.c.l.b16 %v95
    %v388 = vunpack.c.h.b16 %v95
    %v389 = vunpack.c.l.b16 %v96
    %v390 = vunpack.c.h.b16 %v96
    %v391 = vunpack.c.l.b16 %v97
    %v392 = vunpack.c.h.b16 %v97
    %v393 = vunpack.c.l.b16 %v98
    %v394 = vunpack.c.h.b16 %v98
    %v395 = vunpack.c.l.b16 %v99
    %v396 = vunpack.c.h.b16 %v99
    %v397 = vunpack.c.l.b16 %v100
    %v398 = vunpack.c.h.b16 %v100
    %v399 = vunpack.c.l.b16 %v101
    %v400 = vunpack.c.h.b16 %v101
    %v401 = vunpack.c.l.b16 %v102
    %v402 = vunpack.c.h.b16 %v102
    %v403 = vunpack.c.l.b16 %v103
    %v404 = vunpack.c.h.b16 %v103
    %v405 = vunpack.c.l.b16 %v104
    %v406 = vunpack.c.h.b16 %v104
    %v407 = vunpack.c.l.b16 %v105
    %v408 = vunpack.c.h.b16 %v105
    %v409 = vunpack.c.l.b16 %v106
    %v410 = vunpack.c.h.b16 %v106
    %v411 = vunpack.c.l.b16 %v107
    %v412 = vunpack.c.h.b16 %v107
    %v413 = vunpack.c.l.b16 %v108
    %v414 = vunpack.c.h.b16 %v108
    %v415 = vunpack.c.l.b16 %v109
    %v416 = vunpack.c.h.b16 %v109
    %v417 = vunpack.c.l.b16 %v110
    %v418 = vunpack.c.h.b16 %v110
    %v419 = vunpack.c.l.b16 %v111
    %v420 = vunpack.c.h.b16 %v111
    %v421 = vunpack.c.l.b16 %v112
    %v422 = vunpack.c.h.b16 %v112
    %v423 = vunpack.c.l.b16 %v113
    %v424 = vunpack.c.h.b16 %v113
    %v425 = vunpack.c.l.b16 %v114
    %v426 = vunpack.c.h.b16 %v114
    %v427 = vunpack.c.l.b16 %v115
    %v428 = vunpack.c.h.b16 %v115
    %v429 = vunpack.c.l.b16 %v116
    %v430 = vunpack.c.h.b16 %v116
    %v431 = vunpack.c.l.b16 %v117
    %v432 = vunpack.c.h.b16 %v117
    %v433 = vunpack.c.l.b16 %v118
    %v434 = vunpack.c.h.b16 %v118
    %v435 = vunpack.c.l.b16 %v119
    %v436 = vunpack.c.h.b16 %v119
    %v437 = vunpack.c.l.b16 %v120
    %v438 = vunpack.c.h.b16 %v120
    %v439 = vunpack.c.l.b16 %v121
    %v440 = vunpack.c.h.b16 %v121
    %v441 = vunpack.c.l.b16 %v122
    %v442 = vunpack.c.h.b16 %v122
    %v443 = vunpack.c.l.b16 %v123
    %v444 = vunpack.c.h.b16 %v123
    %v445 = vunpack.c.l.b16 %v124
    %v446 = vunpack.c.h.b16 %v124
    %v447 = vunpack.c.l.b16 %v125
    %v448 = vunpack.c.h.b16 %v125
    %v449 = vunpack.c.l.b16 %v126
    %v450 = vunpack.c.h.b16 %v126
    %v451 = vunpack.c.l.b16 %v127
    %v452 = vunpack.c.h.b16 %v127
    %v453 = vunpack.c.l.b16 %v128
    %v454 = vunpack.c.h.b16 %v128
    %v455 = vunpack.c.l.b16 %v129
    %v456 = vunpack.c.h.b16 %v129
    %v457 = vunpack.c.l.b16 %v130
    %v458 = vunpack.c.h.b16 %v130
    %v459 = vunpack.c.l.b16 %v131
    %v460 = vunpack.c.h.b16 %v131
    %v461 = vunpack.c.l.b16 %v132
    %v462 = vunpack.c.h.b16 %v132
    %v463 = vunpack.c.l.b16 %v133
    %v464 = vunpack.c.h.b16 %v133
    %v465 = vunpack.c.l.b16 %v134
    %v466 = vunpack.c.h.b16 %v134
    %v467 = vunpack.c.l.b16 %v135
    %v468 = vunpack.c.h.b16 %v135
    %v469 = vunpack.c.l.b16 %v136
    %v470 = vunpack.c.h.b16 %v136
    %v471 = vunpack.c.l.b16 %v137
    %v472 = vunpack.c.h.b16 %v137
    %v473 = vunpack.c.l.b16 %v138
    %v474 = vunpack.c.h.b16 %v138
    %v475 = vunpack.c.l.b16 %v139
    %v476 = vunpack.c.h.b16 %v139
    %v477 = vunpack.c.l.b16 %v140
    %v478 = vunpack.c.h.b16 %v140
    %v479 = vunpack.c.l.b16 %v141
    %v480 = vunpack.c.h.b16 %v141
    %v481 = vunpack.c.l.b16 %v142
    %v482 = vunpack.c.h.b16 %v142
    %v483 = vunpack.c.l.b16 %v143
    %v484 = vunpack.c.h.b16 %v143
    %v485 = vunpack.c.l.b16 %v144
    %v486 = vunpack.c.h.b16 %v144
    %v487 = vunpack.c.l.b16 %v145
    %v488 = vunpack.c.h.b16 %v145
    %v489 = vunpack.c.l.b16 %v146
    %v490 = vunpack.c.h.b16 %v146
    %v491 = vunpack.c.l.b16 %v147
    %v492 = vunpack.c.h.b16 %v147
    %v493 = vunpack.c.l.b16 %v148
    %v494 = vunpack.c.h.b16 %v148
    %v495 = vunpack.c.l.b16 %v149
    %v496 = vunpack.c.h.b16 %v149
    %v497 = vunpack.c.l.b16 %v150
    %v498 = vunpack.c.h.b16 %v150
    %v499 = vunpack.c.l.b16 %v151
    %v500 = vunpack.c.h.b16 %v151
    %v501 = vunpack.c.l.b16 %v152
    %v502 = vunpack.c.h.b16 %v152
    %v503 = vunpack.c.l.b16 %v153
    %v504 = vunpack.c.h.b16 %v153
    %v505 = vunpack.c.l.b16 %v154
    %v506 = vunpack.c.h.b16 %v154
    %v507 = vunpack.c.l.b16 %v155
    %v508 = vunpack.c.h.b16 %v155
    %v509 = vunpack.c.l.b16 %v156
    %v510 = vunpack.c.h.b16 %v156
    %v511 = vunpack.c.l.b16 %v157
    %v512 = vunpack.c.h.b16 %v157
    %v513 = vunpack.c.l.b16 %v158
    %v514 = vunpack.c.h.b16 %v158
    %v515 = vunpack.c.l.b16 %v159
    %v516 = vunpack.c.h.b16 %v159
    %v517 = vunpack.c.l.b16 %v160
    %v518 = vunpack.c.h.b16 %v160
    %v519 = vunpack.c.l.b16 %v161
    %v520 = vunpack.c.h.b16 %v161
    %v521 = vunpack.c.l.b16 %v162
    %v522 = vunpack.c.h.b16 %v162
    %v523 = vunpack.c.l.b16 %v163
    %v524 = vunpack.c.h.b16 %v163
    %v525 = vunpack.c.l.b16 %v164
    %v526 = vunpack.c.h.b16 %v164
    %v527 = vunpack.c.l.b16 %v165
    %v528 = vunpack.c.h.b16 %v165
    %v529 = vunpack.c.l.b16 %v166
    %v530 = vunpack.c.h.b16 %v166
    %v531 = vunpack.c.l.b16 %v167
    %v532 = vunpack.c.h.b16 %v167
    %v533 = vunpack.c.l.b16 %v168
    %v534 = vunpack.c.h.b16 %v168
    %v535 = vunpack.c.l.b16 %v169
    %v536 = vunpack.c.h.b16 %v169
    %v537 = vunpack.c.l.b16 %v170
    %v538 = vunpack.c.h.b16 %v170
    %v539 = vunpack.c.l.b16 %v171
    %v540 = vunpack.c.h.b16 %v171
    %v541 = vunpack.c.l.b16 %v172
    %v542 = vunpack.c.h.b16 %v172
    %v543 = vunpack.c.l.b16 %v173
    %v544 = vunpack.c.h.b16 %v173
    %v545 = vunpack.c.l.b16 %v174
    %v546 = vunpack.c.h.b16 %v174
    %v547 = vunpack.c.l.b16 %v175
    %v548 = vunpack.c.h.b16 %v175
    %v549 = vunpack.c.l.b16 %v176
    %v550 = vunpack.c.h.b16 %v176
    %v551 = vunpack.c.l.b16 %v177
    %v552 = vunpack.c.h.b16 %v177
    %v553 = vunpack.c.l.b16 %v178
    %v554 = vunpack.c.h.b16 %v178
    %v555 = vunpack.c.l.b16 %v179
    %v556 = vunpack.c.h.b16 %v179
    %v557 = vunpack.c.l.b16 %v180
    %v558 = vunpack.c.h.b16 %v180
    %v559 = vunpack.c.l.b16 %v181
    %v560 = vunpack.c.h.b16 %v181
    %v561 = vunpack.c.l.b16 %v182
    %v562 = vunpack.c.h.b16 %v182
    %v563 = vunpack.c.l.b16 %v183
    %v564 = vunpack.c.h.b16 %v183
    %v565 = vunpack.c.l.b16 %v184
    %v566 = vunpack.c.h.b16 %v184
    %v567 = vunpack.c.l.b16 %v185
    %v568 = vunpack.c.h.b16 %v185
    %v569 = vunpack.c.l.b16 %v186
    %v570 = vunpack.c.h.b16 %v186
    %v571 = vunpack.c.l.b16 %v187
    %v572 = vunpack.c.h.b16 %v187
    %v573 = vunpack.c.l.b16 %v188
    %v574 = vunpack.c.h.b16 %v188
    %v575 = vunpack.c.l.b16 %v189
    %v576 = vunpack.c.h.b16 %v189
    %v577 = vunpack.c.l.b16 %v190
    %v578 = vunpack.c.h.b16 %v190
    %v579 = vunpack.c.l.b16 %v191
    %v580 = vunpack.c.h.b16 %v191
    %v581 = vunpack.c.l.b16 %v192
    %v582 = vunpack.c.h.b16 %v192
    %v583 = vunpack.c.l.b16 %v193
    %v584 = vunpack.c.h.b16 %v193
    %v585 = vunpack.c.l.b16 %v194
    %v586 = vunpack.c.h.b16 %v194
    %v587 = vunpack.c.l.b16 %v195
    %v588 = vunpack.c.h.b16 %v195
    %v589 = vunpack.c.l.b16 %v196
    %v590 = vunpack.c.h.b16 %v196
    %v591 = vunpack.c.l.b16 %v197
    %v592 = vunpack.c.h.b16 %v197
    %v593 = vunpack.c.l.b16 %v198
    %v594 = vunpack.c.h.b16 %v198
    %v595 = vpack.c.b16 %v341, %v339
    %v596 = vpack.c.b16 %v342, %v340
    %v597 = vpack.c.b16 %v345, %v343
    %v598 = vpack.c.b16 %v346, %v344
    %v599 = vpack.c.b16 %v349, %v347
    %v600 = vpack.c.b16 %v350, %v348
    %v601 = vpack.c.b16 %v353, %v351
    %v602 = vpack.c.b16 %v354, %v352
    %v603 = vpack.c.b16 %v357, %v355
    %v604 = vpack.c.b16 %v358, %v356
    %v605 = vpack.c.b16 %v361, %v359
    %v606 = vpack.c.b16 %v362, %v360
    %v607 = vpack.c.b16 %v365, %v363
    %v608 = vpack.c.b16 %v366, %v364
    %v609 = vpack.c.b16 %v369, %v367
    %v610 = vpack.c.b16 %v370, %v368
    %v611 = vpack.c.b16 %v373, %v371
    %v612 = vpack.c.b16 %v374, %v372
    %v613 = vpack.c.b16 %v377, %v375
    %v614 = vpack.c.b16 %v378, %v376
    %v615 = vpack.c.b16 %v381, %v379
    %v616 = vpack.c.b16 %v382, %v380
    %v617 = vpack.c.b16 %v385, %v383
    %v618 = vpack.c.b16 %v386, %v384
    %v619 = vpack.c.b16 %v389, %v387
    %v620 = vpack.c.b16 %v390, %v388
    %v621 = vpack.c.b16 %v393, %v391
    %v622 = vpack.c.b16 %v394, %v392
    %v623 = vpack.c.b16 %v397, %v395
    %v624 = vpack.c.b16 %v398, %v396
    %v625 = vpack.c.b16 %v401, %v399
    %v626 = vpack.c.b16 %v402, %v400
    %v627 = vpack.c.b16 %v405, %v403
    %v628 = vpack.c.b16 %v406, %v404
    %v629 = vpack.c.b16 %v409, %v407
    %v630 = vpack.c.b16 %v410, %v408
    %v631 = vpack.c.b16 %v413, %v411
    %v632 = vpack.c.b16 %v414, %v412
    %v633 = vpack.c.b16 %v417, %v415
    %v634 = vpack.c.b16 %v418, %v416
    %v635 = vpack.c.b16 %v421, %v419
    %v636 = vpack.c.b16 %v422, %v420
    %v637 = vpack.c.b16 %v425, %v423
    %v638 = vpack.c.b16 %v426, %v424
    %v639 = vpack.c.b16 %v429, %v427
    %v640 = vpack.c.b16 %v430, %v428
    %v641 = vpack.c.b16 %v433, %v431
    %v642 = vpack.c.b16 %v434, %v432
    %v643 = vpack.c.b16 %v437, %v435
    %v644 = vpack.c.b16 %v438, %v436
    %v645 = vpack.c.b16 %v441, %v439
    %v646 = vpack.c.b16 %v442, %v440
    %v647 = vpack.c.b16 %v445, %v443
    %v648 = vpack.c.b16 %v446, %v444
    %v649 = vpack.c.b16 %v449, %v447
    %v650 = vpack.c.b16 %v450, %v448
    %v651 = vpack.c.b16 %v453, %v451
    %v652 = vpack.c.b16 %v454, %v452
    %v653 = vpack.c.b16 %v457, %v455
    %v654 = vpack.c.b16 %v458, %v456
    %v655 = vpack.c.b16 %v461, %v459
    %v656 = vpack.c.b16 %v462, %v460
    %v657 = vpack.c.b16 %v465, %v463
    %v658 = vpack.c.b16 %v466, %v464
    %v659 = vpack.c.b16 %v469, %v467
    %v660 = vpack.c.b16 %v470, %v468
    %v661 = vpack.c.b16 %v473, %v471
    %v662 = vpack.c.b16 %v474, %v472
    %v663 = vpack.c.b16 %v477, %v475
    %v664 = vpack.c.b16 %v478, %v476
    %v665 = vpack.c.b16 %v481, %v479
    %v666 = vpack.c.b16 %v482, %v480
    %v667 = vpack.c.b16 %v485, %v483
    %v668 = vpack.c.b16 %v486, %v484
    %v669 = vpack.c.b16 %v489, %v487
    %v670 = vpack.c.b16 %v490, %v488
    %v671 = vpack.c.b16 %v493, %v491
    %v672 = vpack.c.b16 %v494, %v492
    %v673 = vpack.c.b16 %v497, %v495
    %v674 = vpack.c.b16 %v498, %v496
    %v675 = vpack.c.b16 %v501, %v499
    %v676 = vpack.c.b16 %v502, %v500
    %v677 = vpack.c.b16 %v505, %v503
    %v678 = vpack.c.b16 %v506, %v504
    %v679 = vpack.c.b16 %v509, %v507
    %v680 = vpack.c.b16 %v510, %v508
    %v681 = vpack.c.b16 %v513, %v511
    %v682 = vpack.c.b16 %v514, %v512
    %v683 = vpack.c.b16 %v517, %v515
    %v684 = vpack.c.b16 %v518, %v516
    %v685 = vpack.c.b16 %v521, %v519
    %v686 = vpack.c.b16 %v522, %v520
    %v687 = vpack.c.b16 %v525, %v523
    %v688 = vpack.c.b16 %v526, %v524
    %v689 = vpack.c.b16 %v529, %v527
    %v690 = vpack.c.b16 %v530, %v528
    %v691 = vpack.c.b16 %v533, %v531
    %v692 = vpack.c.b16 %v534, %v532
    %v693 = vpack.c.b16 %v537, %v535
    %v694 = vpack.c.b16 %v538, %v536
    %v695 = vpack.c.b16 %v541, %v539
    %v696 = vpack.c.b16 %v542, %v540
    %v697 = vpack.c.b16 %v545, %v543
    %v698 = vpack.c.b16 %v546, %v544
    %v699 = vpack.c.b16 %v549, %v547
    %v700 = vpack.c.b16 %v550, %v548
    %v701 = vpack.c.b16 %v553, %v551
    %v702 = vpack.c.b16 %v554, %v552
    %v703 = vpack.c.b16 %v557, %v555
    %v704 = vpack.c.b16 %v558, %v556
    %v705 = vpack.c.b16 %v561, %v559
    %v706 = vpack.c.b16 %v562, %v560
    %v707 = vpack.c.b16 %v565, %v563
    %v708 = vpack.c.b16 %v566, %v564
    %v709 = vpack.c.b16 %v569, %v567
    %v710 = vpack.c.b16 %v570, %v568
    %v711 = vpack.c.b16 %v573, %v571
    %v712 = vpack.c.b16 %v574, %v572
    %v713 = vpack.c.b16 %v577, %v575
    %v714 = vpack.c.b16 %v578, %v576
    %v715 = vpack.c.b16 %v581, %v579
    %v716 = vpack.c.b16 %v582, %v580
    %v717 = vpack.c.b16 %v585, %v583
    %v718 = vpack.c.b16 %v586, %v584
    %v719 = vpack.c.b16 %v589, %v587
    %v720 = vpack.c.b16 %v590, %v588
    %v721 = vpack.c.b16 %v593, %v591
    %v722 = vpack.c.b16 %v594, %v592
    %851 = vmatprep.subr.bf16.mxu0 %v596
    %852 = vmatpush1.bf16.msra.mxu0 %v595
    %853 = vmatprep.subr.bf16.mxu0 %v598
    %854 = vmatpush1.bf16.msra.mxu0 %v597
    %855 = vmatprep.subr.bf16.mxu0 %v600
    %856 = vmatpush1.bf16.msra.mxu0 %v599
    %857 = vmatprep.subr.bf16.mxu0 %v602
    %858 = vmatpush1.bf16.msra.mxu0 %v601
    %859 = vmatprep.subr.bf16.mxu0 %v604
    %860 = vmatpush1.bf16.msra.mxu0 %v603
    %861 = vmatprep.subr.bf16.mxu0 %v606
    %862 = vmatpush1.bf16.msra.mxu0 %v605
    %863 = vmatprep.subr.bf16.mxu0 %v608
    %864 = vmatpush1.bf16.msra.mxu0 %v607
    %865 = vmatprep.subr.bf16.mxu0 %v610
    %866 = vmatpush1.bf16.msra.mxu0 %v609
    %867 = vmatprep.subr.bf16.mxu0 %v612
    %868 = vmatpush1.bf16.msra.mxu0 %v611
    %869 = vmatprep.subr.bf16.mxu0 %v614
    %870 = vmatpush1.bf16.msra.mxu0 %v613
    %871 = vmatprep.subr.bf16.mxu0 %v616
    %872 = vmatpush1.bf16.msra.mxu0 %v615
    %873 = vmatprep.subr.bf16.mxu0 %v618
    %874 = vmatpush1.bf16.msra.mxu0 %v617
    %875 = vmatprep.subr.bf16.mxu0 %v620
    %876 = vmatpush1.bf16.msra.mxu0 %v619
    %877 = vmatprep.subr.bf16.mxu0 %v622
    %878 = vmatpush1.bf16.msra.mxu0 %v621
    %879 = vmatprep.subr.bf16.mxu0 %v624
    %880 = vmatpush1.bf16.msra.mxu0 %v623
    %881 = vmatprep.subr.bf16.mxu0 %v626
    %882 = vmatpush1.bf16.msra.mxu0 %v625
    %883 = vmatprep.mubr.bf16.mxu0 %v64
    %884 = vmatmul.mubr.bf16.gmra.mrb[0].mxu0 %v63
    %v885 = vpop.f32.mrb[0].mxu0
    %v886 = vadd.f32 %v204, %v885
    %v887 = vpop.f32.mrb[0].mxu0
    %v888 = vadd.f32 %v208, %v887
    %v889 = vpop.f32.mrb[0].mxu0
    %v890 = vpop.f32.mrb[0].mxu0
    %891 = vdwg.mxu0
    %892 = vmatprep.subr.bf16.mxu0 %v628
    %893 = vmatpush1.bf16.msra.mxu0 %v627
    %894 = vmatprep.subr.bf16.mxu0 %v630
    %895 = vmatpush1.bf16.msra.mxu0 %v629
    %896 = vmatprep.subr.bf16.mxu0 %v632
    %897 = vmatpush1.bf16.msra.mxu0 %v631
    %898 = vmatprep.subr.bf16.mxu0 %v634
    %899 = vmatpush1.bf16.msra.mxu0 %v633
    %900 = vmatprep.subr.bf16.mxu0 %v636
    %901 = vmatpush1.bf16.msra.mxu0 %v635
    %902 = vmatprep.subr.bf16.mxu0 %v638
    %903 = vmatpush1.bf16.msra.mxu0 %v637
    %904 = vmatprep.subr.bf16.mxu0 %v640
    %905 = vmatpush1.bf16.msra.mxu0 %v639
    %906 = vmatprep.subr.bf16.mxu0 %v642
    %907 = vmatpush1.bf16.msra.mxu0 %v641
    %908 = vmatprep.subr.bf16.mxu0 %v644
    %909 = vmatpush1.bf16.msra.mxu0 %v643
    %910 = vmatprep.subr.bf16.mxu0 %v646
    %911 = vmatpush1.bf16.msra.mxu0 %v645
    %912 = vmatprep.subr.bf16.mxu0 %v648
    %913 = vmatpush1.bf16.msra.mxu0 %v647
    %914 = vmatprep.subr.bf16.mxu0 %v650
    %915 = vmatpush1.bf16.msra.mxu0 %v649
    %916 = vmatprep.subr.bf16.mxu0 %v652
    %917 = vmatpush1.bf16.msra.mxu0 %v651
    %918 = vmatprep.subr.bf16.mxu0 %v654
    %919 = vmatpush1.bf16.msra.mxu0 %v653
    %920 = vmatprep.subr.bf16.mxu0 %v656
    %921 = vmatpush1.bf16.msra.mxu0 %v655
    %922 = vmatprep.subr.bf16.mxu0 %v658
    %923 = vmatpush1.bf16.msra.mxu0 %v657
    %924 = vmatprep.mubr.bf16.mxu0 %v66
    %925 = vmatmul.mubr.bf16.gmra.mrb[0].mxu0 %v65
    %v926 = vpop.f32.mrb[0].mxu0
    %v927 = vadd.f32 %v886, %v926
    %v928 = vpop.f32.mrb[0].mxu0
    %v929 = vadd.f32 %v888, %v928
    %v930 = vpop.f32.mrb[0].mxu0
    %v931 = vpop.f32.mrb[0].mxu0
    %932 = vdwg.mxu0
    %933 = vmatprep.subr.bf16.mxu0 %v660
    %934 = vmatpush1.bf16.msra.mxu0 %v659
    %935 = vmatprep.subr.bf16.mxu0 %v662
    %936 = vmatpush1.bf16.msra.mxu0 %v661
    %937 = vmatprep.subr.bf16.mxu0 %v664
    %938 = vmatpush1.bf16.msra.mxu0 %v663
    %939 = vmatprep.subr.bf16.mxu0 %v666
    %940 = vmatpush1.bf16.msra.mxu0 %v665
    %941 = vmatprep.subr.bf16.mxu0 %v668
    %942 = vmatpush1.bf16.msra.mxu0 %v667
    %943 = vmatprep.subr.bf16.mxu0 %v670
    %944 = vmatpush1.bf16.msra.mxu0 %v669
    %945 = vmatprep.subr.bf16.mxu0 %v672
    %946 = vmatpush1.bf16.msra.mxu0 %v671
    %947 = vmatprep.subr.bf16.mxu0 %v674
    %948 = vmatpush1.bf16.msra.mxu0 %v673
    %949 = vmatprep.subr.bf16.mxu0 %v676
    %950 = vmatpush1.bf16.msra.mxu0 %v675
    %951 = vmatprep.subr.bf16.mxu0 %v678
    %952 = vmatpush1.bf16.msra.mxu0 %v677
    %953 = vmatprep.subr.bf16.mxu0 %v680
    %954 = vmatpush1.bf16.msra.mxu0 %v679
    %955 = vmatprep.subr.bf16.mxu0 %v682
    %956 = vmatpush1.bf16.msra.mxu0 %v681
    %957 = vmatprep.subr.bf16.mxu0 %v684
    %958 = vmatpush1.bf16.msra.mxu0 %v683
    %959 = vmatprep.subr.bf16.mxu0 %v686
    %960 = vmatpush1.bf16.msra.mxu0 %v685
    %961 = vmatprep.subr.bf16.mxu0 %v688
    %962 = vmatpush1.bf16.msra.mxu0 %v687
    %963 = vmatprep.subr.bf16.mxu0 %v690
    %964 = vmatpush1.bf16.msra.mxu0 %v689
    %965 = vmatprep.mubr.bf16.mxu0 %v68
    %966 = vmatmul.mubr.bf16.gmra.mrb[0].mxu0 %v67
    %v967 = vpop.f32.mrb[0].mxu0
    %v968 = vadd.f32 %v927, %v967
    %v969 = vpop.f32.mrb[0].mxu0
    %v970 = vadd.f32 %v929, %v969
    %v971 = vpop.f32.mrb[0].mxu0
    %v972 = vpop.f32.mrb[0].mxu0
    %973 = vdwg.mxu0
    %974 = vmatprep.subr.bf16.mxu0 %v692
    %975 = vmatpush1.bf16.msra.mxu0 %v691
    %976 = vmatprep.subr.bf16.mxu0 %v694
    %977 = vmatpush1.bf16.msra.mxu0 %v693
    %978 = vmatprep.subr.bf16.mxu0 %v696
    %979 = vmatpush1.bf16.msra.mxu0 %v695
    %980 = vmatprep.subr.bf16.mxu0 %v698
    %981 = vmatpush1.bf16.msra.mxu0 %v697
    %982 = vmatprep.subr.bf16.mxu0 %v700
    %983 = vmatpush1.bf16.msra.mxu0 %v699
    %984 = vmatprep.subr.bf16.mxu0 %v702
    %985 = vmatpush1.bf16.msra.mxu0 %v701
    %986 = vmatprep.subr.bf16.mxu0 %v704
    %987 = vmatpush1.bf16.msra.mxu0 %v703
    %988 = vmatprep.subr.bf16.mxu0 %v706
    %989 = vmatpush1.bf16.msra.mxu0 %v705
    %990 = vmatprep.subr.bf16.mxu0 %v708
    %991 = vmatpush1.bf16.msra.mxu0 %v707
    %992 = vmatprep.subr.bf16.mxu0 %v710
    %993 = vmatpush1.bf16.msra.mxu0 %v709
    %994 = vmatprep.subr.bf16.mxu0 %v712
    %995 = vmatpush1.bf16.msra.mxu0 %v711
    %996 = vmatprep.subr.bf16.mxu0 %v714
    %997 = vmatpush1.bf16.msra.mxu0 %v713
    %998 = vmatprep.subr.bf16.mxu0 %v716
    %999 = vmatpush1.bf16.msra.mxu0 %v715
    %1000 = vmatprep.subr.bf16.mxu0 %v718
    %1001 = vmatpush1.bf16.msra.mxu0 %v717
    %1002 = vmatprep.subr.bf16.mxu0 %v720
    %1003 = vmatpush1.bf16.msra.mxu0 %v719
    %1004 = vmatprep.subr.bf16.mxu0 %v722
    %1005 = vmatpush1.bf16.msra.mxu0 %v721
    %1006 = vmatprep.mubr.bf16.mxu0 %v70
    %1007 = vmatmul.mubr.bf16.gmra.mrb[0].mxu0 %v69
    %v1008 = vpop.f32.mrb[0].mxu0
    %v1009 = vadd.f32 %v968, %v1008
    %v1010 = vpop.f32.mrb[0].mxu0
    %v1011 = vadd.f32 %v970, %v1010
    %v1012 = vpop.f32.mrb[0].mxu0
    %v1013 = vpop.f32.mrb[0].mxu0
    %1014 = vdwg.mxu0
    %v1015 = vmax.f32 %v1009, 0.0
    %v1016 = vmax.f32 %v1011, 0.0
    %v1017 = vpack.c.bf16 %v1015, %v1015
    %v1018 = vpack.c.bf16 %v1016, %v1016
    %v1019 = vld [vmem:[#allocation4] sm:$0xf]
    %v1020 = vld [vmem:[#allocation4 + $0x4] sm:$0xf]
    %v1021 = vld [vmem:[#allocation4 + $0x8] sm:$0xf]
    %v1022 = vld [vmem:[#allocation4 + $0xc] sm:$0xf]
    %v1023 = vld [vmem:[#allocation4 + $0x10] sm:$0xf]
    %v1024 = vld [vmem:[#allocation4 + $0x14] sm:$0xf]
    %v1025 = vld [vmem:[#allocation4 + $0x18] sm:$0xf]
    %v1026 = vld [vmem:[#allocation4 + $0x1c] sm:$0xf]
    %v1027 = vld [vmem:[#allocation4 + $0x20] sm:$0xf]
    %v1028 = vld [vmem:[#allocation4 + $0x24] sm:$0xf]
    %v1029 = vld [vmem:[#allocation4 + $0x28] sm:$0xf]
    %v1030 = vld [vmem:[#allocation4 + $0x2c] sm:$0xf]
    %v1031 = vld [vmem:[#allocation4 + $0x30] sm:$0xf]
    %v1032 = vld [vmem:[#allocation4 + $0x34] sm:$0xf]
    %v1033 = vld [vmem:[#allocation4 + $0x38] sm:$0xf]
    %v1034 = vld [vmem:[#allocation4 + $0x3c] sm:$0xf]
    %v1035 = vld [vmem:[#allocation4 + $0x40] sm:$0xf]
    %v1036 = vld [vmem:[#allocation4 + $0x44] sm:$0xf]
    %v1037 = vld [vmem:[#allocation4 + $0x48] sm:$0xf]
    %v1038 = vld [vmem:[#allocation4 + $0x4c] sm:$0xf]
    %v1039 = vld [vmem:[#allocation4 + $0x50] sm:$0xf]
    %v1040 = vld [vmem:[#allocation4 + $0x54] sm:$0xf]
    %v1041 = vld [vmem:[#allocation4 + $0x58] sm:$0xf]
    %v1042 = vld [vmem:[#allocation4 + $0x5c] sm:$0xf]
    %v1043 = vld [vmem:[#allocation4 + $0x60] sm:$0xf]
    %v1044 = vld [vmem:[#allocation4 + $0x64] sm:$0xf]
    %v1045 = vld [vmem:[#allocation4 + $0x68] sm:$0xf]
    %v1046 = vld [vmem:[#allocation4 + $0x6c] sm:$0xf]
    %v1047 = vld [vmem:[#allocation4 + $0x70] sm:$0xf]
    %v1048 = vld [vmem:[#allocation4 + $0x74] sm:$0xf]
    %v1049 = vld [vmem:[#allocation4 + $0x78] sm:$0xf]
    %v1050 = vld [vmem:[#allocation4 + $0x7c] sm:$0xf]
    %v1051 = vld [vmem:[%s4] sm:$0x1]
    %v1053 = vlaneseq
    %v1054 = vshrl.u32 %v1053, 7
    %v1055 = vsub.s32 0, %v1054
    %v1056 = vrot.slane %v1051, %v1055
    %v1090 = vunpack.c.l.b16 %v1019
    %v1091 = vunpack.c.l.b16 %v1020
    %v1092 = vunpack.c.l.b16 %v1021
    %v1093 = vunpack.c.l.b16 %v1022
    %v1094 = vunpack.c.l.b16 %v1023
    %v1095 = vunpack.c.l.b16 %v1024
    %v1096 = vunpack.c.l.b16 %v1025
    %v1097 = vunpack.c.l.b16 %v1026
    %v1098 = vunpack.c.l.b16 %v1027
    %v1099 = vunpack.c.l.b16 %v1028
    %v1100 = vunpack.c.l.b16 %v1029
    %v1101 = vunpack.c.l.b16 %v1030
    %v1102 = vunpack.c.l.b16 %v1031
    %v1103 = vunpack.c.l.b16 %v1032
    %v1104 = vunpack.c.l.b16 %v1033
    %v1105 = vunpack.c.l.b16 %v1034
    %v1106 = vunpack.c.l.b16 %v1035
    %v1107 = vunpack.c.l.b16 %v1036
    %v1108 = vunpack.c.l.b16 %v1037
    %v1109 = vunpack.c.l.b16 %v1038
    %v1110 = vunpack.c.l.b16 %v1039
    %v1111 = vunpack.c.l.b16 %v1040
    %v1112 = vunpack.c.l.b16 %v1041
    %v1113 = vunpack.c.l.b16 %v1042
    %v1114 = vunpack.c.l.b16 %v1043
    %v1115 = vunpack.c.l.b16 %v1044
    %v1116 = vunpack.c.l.b16 %v1045
    %v1117 = vunpack.c.l.b16 %v1046
    %v1118 = vunpack.c.l.b16 %v1047
    %v1119 = vunpack.c.l.b16 %v1048
    %v1120 = vunpack.c.l.b16 %v1049
    %v1121 = vunpack.c.l.b16 %v1050
    %v1122 = vpack.c.b16 %v1091, %v1090
    %v1123 = vpack.c.b16 %v1093, %v1092
    %v1124 = vpack.c.b16 %v1095, %v1094
    %v1125 = vpack.c.b16 %v1097, %v1096
    %v1126 = vpack.c.b16 %v1099, %v1098
    %v1127 = vpack.c.b16 %v1101, %v1100
    %v1128 = vpack.c.b16 %v1103, %v1102
    %v1129 = vpack.c.b16 %v1105, %v1104
    %v1130 = vpack.c.b16 %v1107, %v1106
    %v1131 = vpack.c.b16 %v1109, %v1108
    %v1132 = vpack.c.b16 %v1111, %v1110
    %v1133 = vpack.c.b16 %v1113, %v1112
    %v1134 = vpack.c.b16 %v1115, %v1114
    %v1135 = vpack.c.b16 %v1117, %v1116
    %v1136 = vpack.c.b16 %v1119, %v1118
    %v1137 = vpack.c.b16 %v1121, %v1120
    %1154 = vmatprep.subr.bf16.mxu0 0
    %1155 = vmatpush1.bf16.msra.mxu0 %v1122
    %1156 = vmatprep.subr.bf16.mxu0 0
    %1157 = vmatpush1.bf16.msra.mxu0 %v1123
    %1158 = vmatprep.subr.bf16.mxu0 0
    %1159 = vmatpush1.bf16.msra.mxu0 %v1124
    %1160 = vmatprep.subr.bf16.mxu0 0
    %1161 = vmatpush1.bf16.msra.mxu0 %v1125
    %1162 = vmatprep.subr.bf16.mxu0 0
    %1163 = vmatpush1.bf16.msra.mxu0 %v1126
    %1164 = vmatprep.subr.bf16.mxu0 0
    %1165 = vmatpush1.bf16.msra.mxu0 %v1127
    %1166 = vmatprep.subr.bf16.mxu0 0
    %1167 = vmatpush1.bf16.msra.mxu0 %v1128
    %1168 = vmatprep.subr.bf16.mxu0 0
    %1169 = vmatpush1.bf16.msra.mxu0 %v1129
    %1170 = vmatprep.subr.bf16.mxu0 0
    %1171 = vmatpush1.bf16.msra.mxu0 %v1130
    %1172 = vmatprep.subr.bf16.mxu0 0
    %1173 = vmatpush1.bf16.msra.mxu0 %v1131
    %1174 = vmatprep.subr.bf16.mxu0 0
    %1175 = vmatpush1.bf16.msra.mxu0 %v1132
    %1176 = vmatprep.subr.bf16.mxu0 0
    %1177 = vmatpush1.bf16.msra.mxu0 %v1133
    %1178 = vmatprep.subr.bf16.mxu0 0
    %1179 = vmatpush1.bf16.msra.mxu0 %v1134
    %1180 = vmatprep.subr.bf16.mxu0 0
    %1181 = vmatpush1.bf16.msra.mxu0 %v1135
    %1182 = vmatprep.subr.bf16.mxu0 0
    %1183 = vmatpush1.bf16.msra.mxu0 %v1136
    %1184 = vmatprep.subr.bf16.mxu0 0
    %1185 = vmatpush1.bf16.msra.mxu0 %v1137
    %1186 = vmatprep.mubr.bf16.mxu0 %v1018
    %1187 = vmatmul.mubr.bf16.gmra.mrb[0].mxu0 %v1017
    %v1188 = vpop.f32.mrb[0].mxu0
    %v1189 = vadd.f32 %v1056, %v1188
    %v1190 = vpop.f32.mrb[0].mxu0
    %v1191 = vpop.f32.mrb[0].mxu0
    %v1192 = vpop.f32.mrb[0].mxu0
    %1193 = vdwg.mxu0
    %v1194 = vmax.f32 %v1189, 0.0
    %v1195 = vpack.c.bf16 %v1194, %v1194
    %v1196 = vld [vmem:[%s5] sm:$0xf]
    %v1197 = vld [vmem:[%s5 + $0x4] sm:$0xf]
    %v1198 = vld [vmem:[%s5 + $0x8] sm:$0xf]
    %v1199 = vld [vmem:[%s5 + $0xc] sm:$0xf]
    %v1200 = vld [vmem:[%s5 + $0x10] sm:$0xf]
    %v1201 = vld [vmem:[%s5 + $0x14] sm:$0xf]
    %v1202 = vld [vmem:[%s5 + $0x18] sm:$0xf]
    %v1203 = vld [vmem:[%s5 + $0x1c] sm:$0xf]
    %v1204 = vld [vmem:[%s5 + $0x20] sm:$0xf]
    %v1205 = vld [vmem:[%s5 + $0x24] sm:$0xf]
    %v1206 = vld [vmem:[%s5 + $0x28] sm:$0xf]
    %v1207 = vld [vmem:[%s5 + $0x2c] sm:$0xf]
    %v1208 = vld [vmem:[%s5 + $0x30] sm:$0xf]
    %v1209 = vld [vmem:[%s5 + $0x34] sm:$0xf]
    %v1210 = vld [vmem:[%s5 + $0x38] sm:$0xf]
    %v1211 = vld [vmem:[%s5 + $0x3c] sm:$0xf]
    %v1212 = vld [vmem:[%s6] sm:$0x1]
    %v1214 = vlaneseq
    %v1215 = vshrl.u32 %v1214, 7
    %v1216 = vsub.s32 0, %v1215
    %v1217 = vrot.slane %v1212, %v1216
    %v1235 = vunpack.c.l.b16 %v1196
    %v1236 = vunpack.c.l.b16 %v1197
    %v1237 = vunpack.c.l.b16 %v1198
    %v1238 = vunpack.c.l.b16 %v1199
    %v1239 = vunpack.c.l.b16 %v1200
    %v1240 = vunpack.c.l.b16 %v1201
    %v1241 = vunpack.c.l.b16 %v1202
    %v1242 = vunpack.c.l.b16 %v1203
    %v1243 = vunpack.c.l.b16 %v1204
    %v1244 = vunpack.c.l.b16 %v1205
    %v1245 = vunpack.c.l.b16 %v1206
    %v1246 = vunpack.c.l.b16 %v1207
    %v1247 = vunpack.c.l.b16 %v1208
    %v1248 = vunpack.c.l.b16 %v1209
    %v1249 = vunpack.c.l.b16 %v1210
    %v1250 = vunpack.c.l.b16 %v1211
    %v1251 = vpack.c.b16 %v1236, %v1235
    %v1252 = vpack.c.b16 %v1238, %v1237
    %v1253 = vpack.c.b16 %v1240, %v1239
    %v1254 = vpack.c.b16 %v1242, %v1241
    %v1255 = vpack.c.b16 %v1244, %v1243
    %v1256 = vpack.c.b16 %v1246, %v1245
    %v1257 = vpack.c.b16 %v1248, %v1247
    %v1258 = vpack.c.b16 %v1250, %v1249
    %1267 = vmatprep.subr.bf16.mxu0 0
    %1268 = vmatpush1.bf16.msra.mxu0 %v1251
    %1269 = vmatprep.subr.bf16.mxu0 0
    %1270 = vmatpush1.bf16.msra.mxu0 %v1252
    %1271 = vmatprep.subr.bf16.mxu0 0
    %1272 = vmatpush1.bf16.msra.mxu0 %v1253
    %1273 = vmatprep.subr.bf16.mxu0 0
    %1274 = vmatpush1.bf16.msra.mxu0 %v1254
    %1275 = vmatprep.subr.bf16.mxu0 0
    %1276 = vmatpush1.bf16.msra.mxu0 %v1255
    %1277 = vmatprep.subr.bf16.mxu0 0
    %1278 = vmatpush1.bf16.msra.mxu0 %v1256
    %1279 = vmatprep.subr.bf16.mxu0 0
    %1280 = vmatpush1.bf16.msra.mxu0 %v1257
    %1281 = vmatprep.subr.bf16.mxu0 0
    %1282 = vmatpush1.bf16.msra.mxu0 %v1258
    %1283 = vmatprep.subr.bf16.mxu0 0
    %1284 = vmatpush1.bf16.msra.mxu0 0
    %1285 = vmatprep.subr.bf16.mxu0 0
    %1286 = vmatpush1.bf16.msra.mxu0 0
    %1287 = vmatprep.subr.bf16.mxu0 0
    %1288 = vmatpush1.bf16.msra.mxu0 0
    %1289 = vmatprep.subr.bf16.mxu0 0
    %1290 = vmatpush1.bf16.msra.mxu0 0
    %1291 = vmatprep.subr.bf16.mxu0 0
    %1292 = vmatpush1.bf16.msra.mxu0 0
    %1293 = vmatprep.subr.bf16.mxu0 0
    %1294 = vmatpush1.bf16.msra.mxu0 0
    %1295 = vmatprep.subr.bf16.mxu0 0
    %1296 = vmatpush1.bf16.msra.mxu0 0
    %1297 = vmatprep.subr.bf16.mxu0 0
    %1298 = vmatpush1.bf16.msra.mxu0 0
    %1299 = vmatprep.mubr.bf16.mxu0 0
    %1300 = vmatmul.mubr.bf16.gmra.mrb[0].mxu0 %v1195
    %v1301 = vpop.f32.mrb[0].mxu0
    %v1302 = vadd.f32 %v1217, %v1301
    %v1303 = vpop.f32.mrb[0].mxu0
    %v1304 = vpop.f32.mrb[0].mxu0
    %v1305 = vpop.f32.mrb[0].mxu0
    %1306 = vdwg.mxu0
    %1307 = vst [vmem:[%s7] sm:$0xff] %v1302
    // Predicated region
    $region38: #{dqn_forward.1} parent=1 // pred_check
      _
    $region39: #{dqn_forward.1} parent=1 // pred_check_branch
      %1309 = sbr.rel (0) target = $region41
    $region40: #{dqn_forward.1} parent=1 // pred_region
      _
    $region41: #{dqn_forward.1} parent=1 // pred_fallthru
      _
    // Predicated region
    $region42: #{dqn_forward.1} parent=1 // pred_check
      _
    $region43: #{dqn_forward.1} parent=1 // pred_check_branch
      %1311 = sbr.rel (0) target = $region45
    $region44: #{dqn_forward.1} parent=1 // pred_region
      _
    $region45: #{dqn_forward.1} parent=1 // pred_fallthru
      _
    %1312 = vsyncpa [#allocation3], 1
    %1313 = vsyncpa [#allocation5], 1

</llo_original>
